<compile_context>
chip_gen: v6e
topology: v6e:2x2x1
jax: 0.10.0
libtpu: 0.0.40
codegen_flags: <defaults>
</compile_context>

<pallas_src>
import jax
import jax.numpy as jnp
from jax.experimental import pallas as pl
from jax.experimental.pallas import tpu as pltpu

KS = 3  # kernel_size


def peg_kernel(w_ref, b_ref, x_ref, o_ref, xpad_ref):
    # w_ref:    VMEM (9, LT)  f32     -- per-tap depthwise weights for this lane tile
    # b_ref:    VMEM (1, LT)  f32     -- bias for this lane tile
    # x_ref:    VMEM (1, H, W, LT)    -- unpadded channels-last input block (native dtype)
    # o_ref:    VMEM (1, H, W, LT)    -- output block (native dtype)
    # xpad_ref: VMEM (H+2, W+2, LT) f32 scratch -- in-kernel halo (border held at zero)
    H, W, LT = o_ref.shape[1], o_ref.shape[2], o_ref.shape[3]
    f32 = jnp.float32

    xv = x_ref[0].astype(f32)  # (H, W, LT)

    # Zero the halo border every step (scratch is uninitialised, and with megacore grid
    # sharding there is no single "first" step per core), then fill the interior once.
    xpad_ref[0:1, :, :] = jnp.zeros((1, W + 2, LT), f32)
    xpad_ref[H + 1:H + 2, :, :] = jnp.zeros((1, W + 2, LT), f32)
    xpad_ref[1:H + 1, 0:1, :] = jnp.zeros((H, 1, LT), f32)
    xpad_ref[1:H + 1, W + 1:W + 2, :] = jnp.zeros((H, 1, LT), f32)
    xpad_ref[1:H + 1, 1:W + 1, :] = xv

    # Residual (= x) + bias initialise the accumulator: no zeros fill, no extra add.
    acc = xv + b_ref[0]

    # Depthwise 3x3 conv as 9 shifted-window VPU MACs (static slices, fully unrolled).
    # Channels stay on lanes; each weight row is one hoisted lane-vector broadcast.
    for ky in range(KS):
        for kx in range(KS):
            acc = acc + w_ref[ky * KS + kx] * xpad_ref[ky:ky + H, kx:kx + W, :]

    o_ref[0] = acc.astype(o_ref.dtype)


def _vmem_budget_bytes():
    """Chip-gated VMEM budget: ~40 MiB on 64 MiB/TC parts (v7x), ~80 MiB on v5e/v6e."""
    cap = 64 * 2 ** 20
    try:
        cap = int(pltpu.get_tpu_info().vmem_capacity_bytes)
    except Exception:
        pass
    return 40 * 2 ** 20 if cap <= 64 * 2 ** 20 else 80 * 2 ** 20


def _lane_tile(N, P, H, W, itemsize, budget_bytes):
    """Largest lane tile (multiple of 128 when possible) fitting the VMEM budget, while
    preferring >= 2 total grid programs so v7x's two TensorCores both get work."""
    def fits(t):
        io = 2 * 2 * H * W * t * itemsize      # double-buffered in + out blocks
        halo = (H + 2) * (W + 2) * t * 4       # f32 halo scratch
        params = 2 * (KS * KS + 1) * t * 4     # double-buffered weights + bias
        return io + halo + params <= budget_bytes

    if N % 128 != 0:
        # Lane-sparse / awkward channel counts: take the whole lane dim in one block.
        return N
    cands = [t for t in range(128, N + 1, 128) if N % t == 0 and fits(t)]
    if not cands:
        # TODO(synk): add an H-tiling grid axis (with in-kernel halo) for very large
        # spatial slabs instead of falling back to the minimum lane tile.
        return 128
    multi = [t for t in cands if (N // t) * P >= 2]
    return max(multi) if multi else max(cands)


def _peg_call(x, w_taps, b_row):
    """Core pallas_call. x: (P, H, W, N) channels-last; w_taps: (9, N) f32; b_row: (1, N) f32."""
    P, H, W, N = x.shape
    itemsize = jnp.dtype(x.dtype).itemsize
    budget = _vmem_budget_bytes()
    LT = _lane_tile(N, P, H, W, itemsize, budget)

    # P innermost: the weight/bias block index is constant across consecutive steps,
    # so those small blocks are not re-DMA'd.
    grid = (N // LT, P)

    cost = pl.CostEstimate(
        flops=(2 * KS * KS + 2) * P * H * W * N,
        transcendentals=0,
        bytes_accessed=2 * P * H * W * N * itemsize + (KS * KS + 1) * N * 4,
    )

    return pl.pallas_call(
        peg_kernel,
        out_shape=jax.ShapeDtypeStruct((P, H, W, N), x.dtype),
        grid_spec=pltpu.PrefetchScalarGridSpec(
            num_scalar_prefetch=0,
            grid=grid,
            in_specs=[
                pl.BlockSpec((KS * KS, LT), lambda c, p: (0, c)),
                pl.BlockSpec((1, LT), lambda c, p: (0, c)),
                pl.BlockSpec((1, H, W, LT), lambda c, p: (p, 0, 0, c)),
            ],
            out_specs=pl.BlockSpec((1, H, W, LT), lambda c, p: (p, 0, 0, c)),
            scratch_shapes=[pltpu.VMEM((H + 2, W + 2, LT), jnp.float32)],
        ),
        compiler_params=pltpu.CompilerParams(
            dimension_semantics=("parallel", "parallel"),
            vmem_limit_bytes=budget,
        ),
        cost_estimate=cost,
    )(w_taps, b_row, x)


def _params_to_lanes(weight, bias):
    C = weight.shape[0]
    w_taps = jnp.transpose(weight.reshape(C, KS * KS), (1, 0)).astype(jnp.float32)  # (9, C)
    b_row = bias.reshape(1, C).astype(jnp.float32)                                  # (1, C)
    return w_taps, b_row


def peg_forward_nhwc(x, weight, bias):
    """PEG on channels-last input: x (B, H, W, C) -> (B, H, W, C). Zero relayout copies,
    native-dtype HBM I/O. Prefer this entry point when the surrounding model is NHWC."""
    w_taps, b_row = _params_to_lanes(weight, bias)
    return _peg_call(x, w_taps, b_row)


def peg_forward(x, weight, bias):
    """PEG matching the PyTorch module layout: x (B, C, H, W) -> (B, C, H, W).

    Exactly one (fused) relayout copy in and one out -- no pad materialisation. If the
    surrounding model keeps activations channels-last, call peg_forward_nhwc and both
    relayout copies disappear.
    """
    B, C, H, W = x.shape
    w_taps, b_row = _params_to_lanes(weight, bias)
    if C % 128 == 0:
        # Lane-dense channels: keep the batch grid axis for parallelism.
        x_nhwc = jnp.transpose(x, (0, 2, 3, 1))
        out = _peg_call(x_nhwc, w_taps, b_row)
        return jnp.transpose(out, (0, 3, 1, 2))
    # Lane-sparse channels (C < 128 or not a multiple of 128): fold B into the lane dim so
    # the output last dim is as lane-dense as the problem allows.
    x_p = jnp.transpose(x, (2, 3, 0, 1)).reshape(1, H, W, B * C)
    out = _peg_call(x_p, jnp.tile(w_taps, (1, B)), jnp.tile(b_row, (1, B)))
    return jnp.transpose(out.reshape(H, W, B, C), (2, 3, 0, 1))


def peg_reference(x, weight, bias):
    """Pure-JAX reference of depthwise 3x3 conv + bias + residual (NCHW, f32 math)."""
    B, C, H, W = x.shape
    pad = KS // 2
    xf = x.astype(jnp.float32)
    xpad = jnp.pad(xf, ((0, 0), (0, 0), (pad, pad), (pad, pad)))
    out = jnp.zeros_like(xf)
    for ky in range(KS):
        for kx in range(KS):
            w = weight[:, 0, ky, kx].astype(jnp.float32).reshape(1, C, 1, 1)
            out = out + w * xpad[:, :, ky:ky + H, kx:kx + W]
    return out + bias.astype(jnp.float32).reshape(1, C, 1, 1) + xf


if __name__ == "__main__":
    key = jax.random.PRNGKey(0)
    k1, k2, k3, k4 = jax.random.split(key, 4)
    fan_in = 1 * KS * KS
    bound = 1.0 / (fan_in ** 0.5)

    # --- Test 1: PyTorch-layout path (B, C, H, W), lane-sparse channels (spec shapes).
    B, C, H, W = 2, 4, 16, 16
    x = jax.random.normal(k1, (B, C, H, W), dtype=jnp.float32)
    weight = jax.random.uniform(k2, (C, 1, KS, KS), jnp.float32, -bound, bound)
    bias = jax.random.uniform(k3, (C,), jnp.float32, -bound, bound)

    out = jax.block_until_ready(peg_forward(x, weight, bias))
    ref = peg_reference(x, weight, bias)
    assert out.shape == (B, C, H, W)
    assert jnp.allclose(out, ref, atol=1e-5, rtol=1e-5), "NCHW path mismatch vs reference"

    # --- Test 2: channels-last, lane-dense, native-bf16 path (zero-relayout entry point).
    C2 = 128
    xb = jax.random.normal(k4, (B, H, W, C2), dtype=jnp.bfloat16)
    w2 = jax.random.uniform(k2, (C2, 1, KS, KS), jnp.float32, -bound, bound)
    b2 = jax.random.uniform(k3, (C2,), jnp.float32, -bound, bound)

    out2 = jax.block_until_ready(peg_forward_nhwc(xb, w2, b2))
    ref2 = jnp.transpose(
        peg_reference(jnp.transpose(xb, (0, 3, 1, 2)), w2, b2), (0, 2, 3, 1))
    assert out2.shape == (B, H, W, C2) and out2.dtype == jnp.bfloat16
    assert jnp.allclose(out2.astype(jnp.float32), ref2, atol=3e-2, rtol=3e-2), \
        "NHWC bf16 path mismatch vs reference"

    print("KERNEL_OK")
</pallas_src>

<mosaic_0001>
module attributes {stable_mosaic.version = 11 : i64} {
  func.func @peg_kernel(%arg0: i32, %arg1: i32, %arg2: memref<9x8xf32, #tpu.memory_space<vmem>>, %arg3: memref<1x8xf32, #tpu.memory_space<vmem>>, %arg4: memref<1x16x16x8xf32, #tpu.memory_space<vmem>>, %arg5: memref<1x16x16x8xf32, #tpu.memory_space<vmem>>, %arg6: memref<18x18x8xf32, #tpu.memory_space<vmem>>) attributes {dimension_semantics = [#tpu.dimension_semantics<parallel>, #tpu.dimension_semantics<parallel>], iteration_bounds = array<i64: 1, 1>, scalar_prefetch = 0 : i64, scratch_operands = 1 : i64, tpu.core_type = #tpu.core_type<tc>, window_params = [{transform_indices = @transform_0, window_bounds = array<i64: 9, 8>}, {transform_indices = @transform_1, window_bounds = array<i64: 1, 8>}, {transform_indices = @transform_2, window_bounds = array<i64: 1, 16, 16, 8>}, {transform_indices = @transform_3, window_bounds = array<i64: 1, 16, 16, 8>}]} {
    %c0 = arith.constant 0 : index
    %c0_0 = arith.constant 0 : index
    %c0_1 = arith.constant 0 : index
    %c0_2 = arith.constant 0 : index
    %0 = vector.load %arg4[%c0, %c0_0, %c0_1, %c0_2] : memref<1x16x16x8xf32, #tpu.memory_space<vmem>>, vector<1x16x16x8xf32>
    %1 = vector.shape_cast %0 : vector<1x16x16x8xf32> to vector<16x16x8xf32>
    %cst = arith.constant 0.000000e+00 : f32
    %2 = vector.broadcast %cst : f32 to vector<1x18x8xf32>
    %c0_3 = arith.constant 0 : index
    %c0_4 = arith.constant 0 : index
    %c0_5 = arith.constant 0 : index
    %3 = vector.load %arg6[%c0_3, %c0_4, %c0_5] : memref<18x18x8xf32, #tpu.memory_space<vmem>>, vector<1x18x8xf32>
    tpu.vector_store %arg6[%c0_3, %c0_4, %c0_5], %2 {strides = array<i32>} : memref<18x18x8xf32, #tpu.memory_space<vmem>>, vector<1x18x8xf32>,
    %cst_6 = arith.constant 0.000000e+00 : f32
    %4 = vector.broadcast %cst_6 : f32 to vector<1x18x8xf32>
    %c17 = arith.constant 17 : index
    %c0_7 = arith.constant 0 : index
    %c0_8 = arith.constant 0 : index
    %5 = vector.load %arg6[%c17, %c0_7, %c0_8] : memref<18x18x8xf32, #tpu.memory_space<vmem>>, vector<1x18x8xf32>
    tpu.vector_store %arg6[%c17, %c0_7, %c0_8], %4 {strides = array<i32>} : memref<18x18x8xf32, #tpu.memory_space<vmem>>, vector<1x18x8xf32>,
    %cst_9 = arith.constant 0.000000e+00 : f32
    %6 = vector.broadcast %cst_9 : f32 to vector<16x1x8xf32>
    %c1 = arith.constant 1 : index
    %c0_10 = arith.constant 0 : index
    %c0_11 = arith.constant 0 : index
    %7 = vector.load %arg6[%c1, %c0_10, %c0_11] : memref<18x18x8xf32, #tpu.memory_space<vmem>>, vector<16x1x8xf32>
    tpu.vector_store %arg6[%c1, %c0_10, %c0_11], %6 {strides = array<i32>} : memref<18x18x8xf32, #tpu.memory_space<vmem>>, vector<16x1x8xf32>,
    %cst_12 = arith.constant 0.000000e+00 : f32
    %8 = vector.broadcast %cst_12 : f32 to vector<16x1x8xf32>
    %c1_13 = arith.constant 1 : index
    %c17_14 = arith.constant 17 : index
    %c0_15 = arith.constant 0 : index
    %9 = vector.load %arg6[%c1_13, %c17_14, %c0_15] : memref<18x18x8xf32, #tpu.memory_space<vmem>>, vector<16x1x8xf32>
    tpu.vector_store %arg6[%c1_13, %c17_14, %c0_15], %8 {strides = array<i32>} : memref<18x18x8xf32, #tpu.memory_space<vmem>>, vector<16x1x8xf32>,
    %c1_16 = arith.constant 1 : index
    %c1_17 = arith.constant 1 : index
    %c0_18 = arith.constant 0 : index
    %10 = vector.load %arg6[%c1_16, %c1_17, %c0_18] : memref<18x18x8xf32, #tpu.memory_space<vmem>>, vector<16x16x8xf32>
    tpu.vector_store %arg6[%c1_16, %c1_17, %c0_18], %1 {strides = array<i32>} : memref<18x18x8xf32, #tpu.memory_space<vmem>>, vector<16x16x8xf32>,
    %c0_19 = arith.constant 0 : index
    %c0_20 = arith.constant 0 : index
    %11 = vector.load %arg3[%c0_19, %c0_20] : memref<1x8xf32, #tpu.memory_space<vmem>>, vector<1x8xf32>
    %12 = vector.shape_cast %11 : vector<1x8xf32> to vector<8xf32>
    %13 = vector.shape_cast %12 : vector<8xf32> to vector<1x1x8xf32>
    %14 = vector.broadcast %13 : vector<1x1x8xf32> to vector<16x16x8xf32>
    %15 = arith.addf %1, %14 : vector<16x16x8xf32>
    %c0_21 = arith.constant 0 : index
    %c0_22 = arith.constant 0 : index
    %16 = vector.load %arg2[%c0_21, %c0_22] : memref<9x8xf32, #tpu.memory_space<vmem>>, vector<1x8xf32>
    %17 = vector.shape_cast %16 : vector<1x8xf32> to vector<8xf32>
    %c0_23 = arith.constant 0 : index
    %c0_24 = arith.constant 0 : index
    %c0_25 = arith.constant 0 : index
    %18 = vector.load %arg6[%c0_23, %c0_24, %c0_25] : memref<18x18x8xf32, #tpu.memory_space<vmem>>, vector<16x16x8xf32>
    %19 = vector.shape_cast %17 : vector<8xf32> to vector<1x1x8xf32>
    %20 = vector.broadcast %19 : vector<1x1x8xf32> to vector<16x16x8xf32>
    %21 = arith.mulf %20, %18 : vector<16x16x8xf32>
    %22 = arith.addf %15, %21 : vector<16x16x8xf32>
    %c1_26 = arith.constant 1 : index
    %c0_27 = arith.constant 0 : index
    %23 = vector.load %arg2[%c1_26, %c0_27] : memref<9x8xf32, #tpu.memory_space<vmem>>, vector<1x8xf32>
    %24 = vector.shape_cast %23 : vector<1x8xf32> to vector<8xf32>
    %c0_28 = arith.constant 0 : index
    %c1_29 = arith.constant 1 : index
    %c0_30 = arith.constant 0 : index
    %25 = vector.load %arg6[%c0_28, %c1_29, %c0_30] : memref<18x18x8xf32, #tpu.memory_space<vmem>>, vector<16x16x8xf32>
    %26 = vector.shape_cast %24 : vector<8xf32> to vector<1x1x8xf32>
    %27 = vector.broadcast %26 : vector<1x1x8xf32> to vector<16x16x8xf32>
    %28 = arith.mulf %27, %25 : vector<16x16x8xf32>
    %29 = arith.addf %22, %28 : vector<16x16x8xf32>
    %c2 = arith.constant 2 : index
    %c0_31 = arith.constant 0 : index
    %30 = vector.load %arg2[%c2, %c0_31] : memref<9x8xf32, #tpu.memory_space<vmem>>, vector<1x8xf32>
    %31 = vector.shape_cast %30 : vector<1x8xf32> to vector<8xf32>
    %c0_32 = arith.constant 0 : index
    %c2_33 = arith.constant 2 : index
    %c0_34 = arith.constant 0 : index
    %32 = vector.load %arg6[%c0_32, %c2_33, %c0_34] : memref<18x18x8xf32, #tpu.memory_space<vmem>>, vector<16x16x8xf32>
    %33 = vector.shape_cast %31 : vector<8xf32> to vector<1x1x8xf32>
    %34 = vector.broadcast %33 : vector<1x1x8xf32> to vector<16x16x8xf32>
    %35 = arith.mulf %34, %32 : vector<16x16x8xf32>
    %36 = arith.addf %29, %35 : vector<16x16x8xf32>
    %c3 = arith.constant 3 : index
    %c0_35 = arith.constant 0 : index
    %37 = vector.load %arg2[%c3, %c0_35] : memref<9x8xf32, #tpu.memory_space<vmem>>, vector<1x8xf32>
    %38 = vector.shape_cast %37 : vector<1x8xf32> to vector<8xf32>
    %c1_36 = arith.constant 1 : index
    %c0_37 = arith.constant 0 : index
    %c0_38 = arith.constant 0 : index
    %39 = vector.load %arg6[%c1_36, %c0_37, %c0_38] : memref<18x18x8xf32, #tpu.memory_space<vmem>>, vector<16x16x8xf32>
    %40 = vector.shape_cast %38 : vector<8xf32> to vector<1x1x8xf32>
    %41 = vector.broadcast %40 : vector<1x1x8xf32> to vector<16x16x8xf32>
    %42 = arith.mulf %41, %39 : vector<16x16x8xf32>
    %43 = arith.addf %36, %42 : vector<16x16x8xf32>
    %c4 = arith.constant 4 : index
    %c0_39 = arith.constant 0 : index
    %44 = vector.load %arg2[%c4, %c0_39] : memref<9x8xf32, #tpu.memory_space<vmem>>, vector<1x8xf32>
    %45 = vector.shape_cast %44 : vector<1x8xf32> to vector<8xf32>
    %c1_40 = arith.constant 1 : index
    %c1_41 = arith.constant 1 : index
    %c0_42 = arith.constant 0 : index
    %46 = vector.load %arg6[%c1_40, %c1_41, %c0_42] : memref<18x18x8xf32, #tpu.memory_space<vmem>>, vector<16x16x8xf32>
    %47 = vector.shape_cast %45 : vector<8xf32> to vector<1x1x8xf32>
    %48 = vector.broadcast %47 : vector<1x1x8xf32> to vector<16x16x8xf32>
    %49 = arith.mulf %48, %46 : vector<16x16x8xf32>
    %50 = arith.addf %43, %49 : vector<16x16x8xf32>
    %c5 = arith.constant 5 : index
    %c0_43 = arith.constant 0 : index
    %51 = vector.load %arg2[%c5, %c0_43] : memref<9x8xf32, #tpu.memory_space<vmem>>, vector<1x8xf32>
    %52 = vector.shape_cast %51 : vector<1x8xf32> to vector<8xf32>
    %c1_44 = arith.constant 1 : index
    %c2_45 = arith.constant 2 : index
    %c0_46 = arith.constant 0 : index
    %53 = vector.load %arg6[%c1_44, %c2_45, %c0_46] : memref<18x18x8xf32, #tpu.memory_space<vmem>>, vector<16x16x8xf32>
    %54 = vector.shape_cast %52 : vector<8xf32> to vector<1x1x8xf32>
    %55 = vector.broadcast %54 : vector<1x1x8xf32> to vector<16x16x8xf32>
    %56 = arith.mulf %55, %53 : vector<16x16x8xf32>
    %57 = arith.addf %50, %56 : vector<16x16x8xf32>
    %c6 = arith.constant 6 : index
    %c0_47 = arith.constant 0 : index
    %58 = vector.load %arg2[%c6, %c0_47] : memref<9x8xf32, #tpu.memory_space<vmem>>, vector<1x8xf32>
    %59 = vector.shape_cast %58 : vector<1x8xf32> to vector<8xf32>
    %c2_48 = arith.constant 2 : index
    %c0_49 = arith.constant 0 : index
    %c0_50 = arith.constant 0 : index
    %60 = vector.load %arg6[%c2_48, %c0_49, %c0_50] : memref<18x18x8xf32, #tpu.memory_space<vmem>>, vector<16x16x8xf32>
    %61 = vector.shape_cast %59 : vector<8xf32> to vector<1x1x8xf32>
    %62 = vector.broadcast %61 : vector<1x1x8xf32> to vector<16x16x8xf32>
    %63 = arith.mulf %62, %60 : vector<16x16x8xf32>
    %64 = arith.addf %57, %63 : vector<16x16x8xf32>
    %c7 = arith.constant 7 : index
    %c0_51 = arith.constant 0 : index
    %65 = vector.load %arg2[%c7, %c0_51] : memref<9x8xf32, #tpu.memory_space<vmem>>, vector<1x8xf32>
    %66 = vector.shape_cast %65 : vector<1x8xf32> to vector<8xf32>
    %c2_52 = arith.constant 2 : index
    %c1_53 = arith.constant 1 : index
    %c0_54 = arith.constant 0 : index
    %67 = vector.load %arg6[%c2_52, %c1_53, %c0_54] : memref<18x18x8xf32, #tpu.memory_space<vmem>>, vector<16x16x8xf32>
    %68 = vector.shape_cast %66 : vector<8xf32> to vector<1x1x8xf32>
    %69 = vector.broadcast %68 : vector<1x1x8xf32> to vector<16x16x8xf32>
    %70 = arith.mulf %69, %67 : vector<16x16x8xf32>
    %71 = arith.addf %64, %70 : vector<16x16x8xf32>
    %c8 = arith.constant 8 : index
    %c0_55 = arith.constant 0 : index
    %72 = vector.load %arg2[%c8, %c0_55] : memref<9x8xf32, #tpu.memory_space<vmem>>, vector<1x8xf32>
    %73 = vector.shape_cast %72 : vector<1x8xf32> to vector<8xf32>
    %c2_56 = arith.constant 2 : index
    %c2_57 = arith.constant 2 : index
    %c0_58 = arith.constant 0 : index
    %74 = vector.load %arg6[%c2_56, %c2_57, %c0_58] : memref<18x18x8xf32, #tpu.memory_space<vmem>>, vector<16x16x8xf32>
    %75 = vector.shape_cast %73 : vector<8xf32> to vector<1x1x8xf32>
    %76 = vector.broadcast %75 : vector<1x1x8xf32> to vector<16x16x8xf32>
    %77 = arith.mulf %76, %74 : vector<16x16x8xf32>
    %78 = arith.addf %71, %77 : vector<16x16x8xf32>
    %c0_59 = arith.constant 0 : index
    %c0_60 = arith.constant 0 : index
    %c0_61 = arith.constant 0 : index
    %c0_62 = arith.constant 0 : index
    %79 = vector.load %arg5[%c0_59, %c0_60, %c0_61, %c0_62] : memref<1x16x16x8xf32, #tpu.memory_space<vmem>>, vector<1x16x16x8xf32>
    %80 = vector.shape_cast %79 : vector<1x16x16x8xf32> to vector<16x16x8xf32>
    %81 = vector.shape_cast %78 : vector<16x16x8xf32> to vector<1x16x16x8xf32>
    tpu.vector_store %arg5[%c0_59, %c0_60, %c0_61, %c0_62], %81 {strides = array<i32>} : memref<1x16x16x8xf32, #tpu.memory_space<vmem>>, vector<1x16x16x8xf32>,
    return
  }
  func.func @transform_0(%arg0: i32, %arg1: i32) -> (i32, i32) {
    %c0_i32 = arith.constant 0 : i32
    %c0_i32_0 = arith.constant 0 : i32
    return %c0_i32, %arg0 : i32, i32
  }
  func.func @transform_1(%arg0: i32, %arg1: i32) -> (i32, i32) {
    %c0_i32 = arith.constant 0 : i32
    %c0_i32_0 = arith.constant 0 : i32
    return %c0_i32, %arg0 : i32, i32
  }
  func.func @transform_2(%arg0: i32, %arg1: i32) -> (i32, i32, i32, i32) {
    %c0_i32 = arith.constant 0 : i32
    %c0_i32_0 = arith.constant 0 : i32
    %c0_i32_1 = arith.constant 0 : i32
    return %arg1, %c0_i32, %c0_i32_0, %arg0 : i32, i32, i32, i32
  }
  func.func @transform_3(%arg0: i32, %arg1: i32) -> (i32, i32, i32, i32) {
    %c0_i32 = arith.constant 0 : i32
    %c0_i32_0 = arith.constant 0 : i32
    %c0_i32_1 = arith.constant 0 : i32
    return %arg1, %c0_i32, %c0_i32_0, %arg0 : i32, i32, i32, i32
  }
}

</mosaic_0001>

<llo_original>
// kernel: tpu_custom_call.1
$region0: #{tpu_custom_call.1}
  #allocation0 [shape = 'u32[]', space=smem, size = 0x4, offset = 0x4, fixed_abs, tag = 'smem constant byte address 0x4 - core index']
  #allocation1 [shape = 'u32[144,128]{1,0:T(1,128)}', space=vmem, size = 0x12000, scoped, tag = 'internal scratch']
  #allocation2 [shape = 'f32[18,18,8]{2,1,0:T(8,128)}', space=vmem, size = 0x36000, scoped, tag = 'scratch operand']
  %s0 = inlined_call_operand.vmem [shape: f32[9,8], index: 0, kind: input, shape index: {}]
  %s1 = inlined_call_operand.vmem [shape: f32[1,8], index: 1, kind: input, shape index: {}]
  %s2 = inlined_call_operand.vmem [shape: f32[1,16,16,8], index: 2, kind: input, shape index: {}]
  %s3 = inlined_call_operand.vmem [shape: f32[1,16,16,8], index: 3, kind: output, shape index: {}]
  %s4 = sld [smem:[#allocation0]]
  $region22: #{tpu_custom_call.1} parent=0
    _
  %s6 = ssub.s32 1, %s4
  %s7 = scalar_select 0, %s6, %s4
  // Predicated region
  $region2: #{tpu_custom_call.1} parent=0 // pred_check
    _
  $region3: #{tpu_custom_call.1} parent=0 // pred_check_branch
    %9 = sbr.rel (0) target = $region5
  $region4: #{tpu_custom_call.1} parent=0 // pred_region
    _
  $region5: #{tpu_custom_call.1} parent=0 // pred_fallthru
    _
  // Predicated region
  $region6: #{tpu_custom_call.1} parent=0 // pred_check
    _
  $region7: #{tpu_custom_call.1} parent=0 // pred_check_branch
    %11 = sbr.rel (0) target = $region9
  $region8: #{tpu_custom_call.1} parent=0 // pred_region
    _
  $region9: #{tpu_custom_call.1} parent=0 // pred_fallthru
    _
  // Predicated region
  $region10: #{tpu_custom_call.1} parent=0 // pred_check
    _
  $region11: #{tpu_custom_call.1} parent=0 // pred_check_branch
    %13 = sbr.rel (0) target = $region13
  $region12: #{tpu_custom_call.1} parent=0 // pred_region
    _
  $region13: #{tpu_custom_call.1} parent=0 // pred_fallthru
    _
  %v14 = vld [vmem:[%s2] sm:$0xff]
  %v15 = vld [vmem:[%s2 + $0x8] sm:$0xff]
  %v16 = vld [vmem:[%s2 + $0x10] sm:$0xff]
  %v17 = vld [vmem:[%s2 + $0x18] sm:$0xff]
  %v18 = vld [vmem:[%s2 + $0x20] sm:$0xff]
  %v19 = vld [vmem:[%s2 + $0x28] sm:$0xff]
  %v20 = vld [vmem:[%s2 + $0x30] sm:$0xff]
  %v21 = vld [vmem:[%s2 + $0x38] sm:$0xff]
  %v22 = vld [vmem:[%s2 + $0x40] sm:$0xff]
  %v23 = vld [vmem:[%s2 + $0x48] sm:$0xff]
  %v24 = vld [vmem:[%s2 + $0x50] sm:$0xff]
  %v25 = vld [vmem:[%s2 + $0x58] sm:$0xff]
  %v26 = vld [vmem:[%s2 + $0x60] sm:$0xff]
  %v27 = vld [vmem:[%s2 + $0x68] sm:$0xff]
  %v28 = vld [vmem:[%s2 + $0x70] sm:$0xff]
  %v29 = vld [vmem:[%s2 + $0x78] sm:$0xff]
  %v30 = vld [vmem:[%s2 + $0x80] sm:$0xff]
  %v31 = vld [vmem:[%s2 + $0x88] sm:$0xff]
  %v32 = vld [vmem:[%s2 + $0x90] sm:$0xff]
  %v33 = vld [vmem:[%s2 + $0x98] sm:$0xff]
  %v34 = vld [vmem:[%s2 + $0xa0] sm:$0xff]
  %v35 = vld [vmem:[%s2 + $0xa8] sm:$0xff]
  %v36 = vld [vmem:[%s2 + $0xb0] sm:$0xff]
  %v37 = vld [vmem:[%s2 + $0xb8] sm:$0xff]
  %v38 = vld [vmem:[%s2 + $0xc0] sm:$0xff]
  %v39 = vld [vmem:[%s2 + $0xc8] sm:$0xff]
  %v40 = vld [vmem:[%s2 + $0xd0] sm:$0xff]
  %v41 = vld [vmem:[%s2 + $0xd8] sm:$0xff]
  %v42 = vld [vmem:[%s2 + $0xe0] sm:$0xff]
  %v43 = vld [vmem:[%s2 + $0xe8] sm:$0xff]
  %v44 = vld [vmem:[%s2 + $0xf0] sm:$0xff]
  %v45 = vld [vmem:[%s2 + $0xf8] sm:$0xff]
  %vm46 = vcmask 64512
  %47 = vst.msk [vmem:[#allocation2] sm:$0xff] %vm46, 0.0
  %48 = vst.msk [vmem:[#allocation2 + $0x8] sm:$0xff] %vm46, 0.0
  %vm49 = vcmask 58368
  %50 = vst.msk [vmem:[#allocation2 + $0x10] sm:$0x3] %vm49, 0.0
  %s51 = scalar_lea.vmem [#allocation2], 408
  %52 = vst.msk [vmem:[%s51] sm:$0xff] %vm46, 0.0
  %53 = vst.msk [vmem:[%s51 + $0x8] sm:$0xff] %vm46, 0.0
  %54 = vst.msk [vmem:[%s51 + $0x10] sm:$0x3] %vm49, 0.0
  %s55 = scalar_lea.vmem [#allocation2], 24
  %vm56 = vcmask 57344
  %57 = vst.msk [vmem:[%s55] sm:$0x1] %vm56, 0.0
  %58 = vst.msk [vmem:[%s55 + $0x18] sm:$0x1] %vm56, 0.0
  %59 = vst.msk [vmem:[%s55 + $0x30] sm:$0x1] %vm56, 0.0
  %60 = vst.msk [vmem:[%s55 + $0x48] sm:$0x1] %vm56, 0.0
  %61 = vst.msk [vmem:[%s55 + $0x60] sm:$0x1] %vm56, 0.0
  %62 = vst.msk [vmem:[%s55 + $0x78] sm:$0x1] %vm56, 0.0
  %63 = vst.msk [vmem:[%s55 + $0x90] sm:$0x1] %vm56, 0.0
  %64 = vst.msk [vmem:[%s55 + $0xa8] sm:$0x1] %vm56, 0.0
  %65 = vst.msk [vmem:[%s55 + $0xc0] sm:$0x1] %vm56, 0.0
  %66 = vst.msk [vmem:[%s55 + $0xd8] sm:$0x1] %vm56, 0.0
  %67 = vst.msk [vmem:[%s55 + $0xf0] sm:$0x1] %vm56, 0.0
  %68 = vst.msk [vmem:[%s55 + $0x108] sm:$0x1] %vm56, 0.0
  %69 = vst.msk [vmem:[%s55 + $0x120] sm:$0x1] %vm56, 0.0
  %70 = vst.msk [vmem:[%s55 + $0x138] sm:$0x1] %vm56, 0.0
  %71 = vst.msk [vmem:[%s55 + $0x150] sm:$0x1] %vm56, 0.0
  %72 = vst.msk [vmem:[%s55 + $0x168] sm:$0x1] %vm56, 0.0
  %73 = vst.msk [vmem:[%s55 + $0x11] sm:$0x1] %vm56, 0.0
  %74 = vst.msk [vmem:[%s55 + $0x29] sm:$0x1] %vm56, 0.0
  %75 = vst.msk [vmem:[%s55 + $0x41] sm:$0x1] %vm56, 0.0
  %76 = vst.msk [vmem:[%s55 + $0x59] sm:$0x1] %vm56, 0.0
  %77 = vst.msk [vmem:[%s55 + $0x71] sm:$0x1] %vm56, 0.0
  %78 = vst.msk [vmem:[%s55 + $0x89] sm:$0x1] %vm56, 0.0
  %79 = vst.msk [vmem:[%s55 + $0xa1] sm:$0x1] %vm56, 0.0
  %80 = vst.msk [vmem:[%s55 + $0xb9] sm:$0x1] %vm56, 0.0
  %81 = vst.msk [vmem:[%s55 + $0xd1] sm:$0x1] %vm56, 0.0
  %82 = vst.msk [vmem:[%s55 + $0xe9] sm:$0x1] %vm56, 0.0
  %83 = vst.msk [vmem:[%s55 + $0x101] sm:$0x1] %vm56, 0.0
  %84 = vst.msk [vmem:[%s55 + $0x119] sm:$0x1] %vm56, 0.0
  %85 = vst.msk [vmem:[%s55 + $0x131] sm:$0x1] %vm56, 0.0
  %86 = vst.msk [vmem:[%s55 + $0x149] sm:$0x1] %vm56, 0.0
  %87 = vst.msk [vmem:[%s55 + $0x161] sm:$0x1] %vm56, 0.0
  %88 = vst.msk [vmem:[%s55 + $0x179] sm:$0x1] %vm56, 0.0
  %89 = vst.msk [vmem:[%s55 + $0x1] sm:$0xff] %vm46, %v14
  %90 = vst.msk [vmem:[%s55 + $0x9] sm:$0xff] %vm46, %v15
  %91 = vst.msk [vmem:[%s55 + $0x19] sm:$0xff] %vm46, %v16
  %92 = vst.msk [vmem:[%s55 + $0x21] sm:$0xff] %vm46, %v17
  %93 = vst.msk [vmem:[%s55 + $0x31] sm:$0xff] %vm46, %v18
  %94 = vst.msk [vmem:[%s55 + $0x39] sm:$0xff] %vm46, %v19
  %95 = vst.msk [vmem:[%s55 + $0x49] sm:$0xff] %vm46, %v20
  %96 = vst.msk [vmem:[%s55 + $0x51] sm:$0xff] %vm46, %v21
  %97 = vst.msk [vmem:[%s55 + $0x61] sm:$0xff] %vm46, %v22
  %98 = vst.msk [vmem:[%s55 + $0x69] sm:$0xff] %vm46, %v23
  %99 = vst.msk [vmem:[%s55 + $0x79] sm:$0xff] %vm46, %v24
  %100 = vst.msk [vmem:[%s55 + $0x81] sm:$0xff] %vm46, %v25
  %101 = vst.msk [vmem:[%s55 + $0x91] sm:$0xff] %vm46, %v26
  %102 = vst.msk [vmem:[%s55 + $0x99] sm:$0xff] %vm46, %v27
  %103 = vst.msk [vmem:[%s55 + $0xa9] sm:$0xff] %vm46, %v28
  %104 = vst.msk [vmem:[%s55 + $0xb1] sm:$0xff] %vm46, %v29
  %105 = vst.msk [vmem:[%s55 + $0xc1] sm:$0xff] %vm46, %v30
  %106 = vst.msk [vmem:[%s55 + $0xc9] sm:$0xff] %vm46, %v31
  %107 = vst.msk [vmem:[%s55 + $0xd9] sm:$0xff] %vm46, %v32
  %108 = vst.msk [vmem:[%s55 + $0xe1] sm:$0xff] %vm46, %v33
  %109 = vst.msk [vmem:[%s55 + $0xf1] sm:$0xff] %vm46, %v34
  %110 = vst.msk [vmem:[%s55 + $0xf9] sm:$0xff] %vm46, %v35
  %111 = vst.msk [vmem:[%s55 + $0x109] sm:$0xff] %vm46, %v36
  %112 = vst.msk [vmem:[%s55 + $0x111] sm:$0xff] %vm46, %v37
  %113 = vst.msk [vmem:[%s55 + $0x121] sm:$0xff] %vm46, %v38
  %114 = vst.msk [vmem:[%s55 + $0x129] sm:$0xff] %vm46, %v39
  %115 = vst.msk [vmem:[%s55 + $0x139] sm:$0xff] %vm46, %v40
  %116 = vst.msk [vmem:[%s55 + $0x141] sm:$0xff] %vm46, %v41
  %117 = vst.msk [vmem:[%s55 + $0x151] sm:$0xff] %vm46, %v42
  %118 = vst.msk [vmem:[%s55 + $0x159] sm:$0xff] %vm46, %v43
  %119 = vst.msk [vmem:[%s55 + $0x169] sm:$0xff] %vm46, %v44
  %120 = vst.msk [vmem:[%s55 + $0x171] sm:$0xff] %vm46, %v45
  %v121 = vld [vmem:[%s1] sm:$0x1]
  %v123 = vlaneseq
  %v124 = vshrl.u32 %v123, 7
  %v125 = vsub.s32 0, %v124
  %v126 = vrot.slane %v121, %v125
  %v128 = vadd.f32 %v14, %v126
  %v129 = vadd.f32 %v15, %v126
  %v130 = vadd.f32 %v16, %v126
  %v131 = vadd.f32 %v17, %v126
  %v132 = vadd.f32 %v18, %v126
  %v133 = vadd.f32 %v19, %v126
  %v134 = vadd.f32 %v20, %v126
  %v135 = vadd.f32 %v21, %v126
  %v136 = vadd.f32 %v22, %v126
  %v137 = vadd.f32 %v23, %v126
  %v138 = vadd.f32 %v24, %v126
  %v139 = vadd.f32 %v25, %v126
  %v140 = vadd.f32 %v26, %v126
  %v141 = vadd.f32 %v27, %v126
  %v142 = vadd.f32 %v28, %v126
  %v143 = vadd.f32 %v29, %v126
  %v144 = vadd.f32 %v30, %v126
  %v145 = vadd.f32 %v31, %v126
  %v146 = vadd.f32 %v32, %v126
  %v147 = vadd.f32 %v33, %v126
  %v148 = vadd.f32 %v34, %v126
  %v149 = vadd.f32 %v35, %v126
  %v150 = vadd.f32 %v36, %v126
  %v151 = vadd.f32 %v37, %v126
  %v152 = vadd.f32 %v38, %v126
  %v153 = vadd.f32 %v39, %v126
  %v154 = vadd.f32 %v40, %v126
  %v155 = vadd.f32 %v41, %v126
  %v156 = vadd.f32 %v42, %v126
  %v157 = vadd.f32 %v43, %v126
  %v158 = vadd.f32 %v44, %v126
  %v159 = vadd.f32 %v45, %v126
  %v160 = vld [vmem:[%s0] sm:$0x1]
  %v161 = vld [vmem:[#allocation2] sm:$0xff]
  %v162 = vld [vmem:[#allocation2 + $0x8] sm:$0xff]
  %v163 = vld [vmem:[#allocation2 + $0x18] sm:$0xff]
  %v164 = vld [vmem:[#allocation2 + $0x20] sm:$0xff]
  %v165 = vld [vmem:[#allocation2 + $0x30] sm:$0xff]
  %v166 = vld [vmem:[#allocation2 + $0x38] sm:$0xff]
  %v167 = vld [vmem:[#allocation2 + $0x48] sm:$0xff]
  %v168 = vld [vmem:[#allocation2 + $0x50] sm:$0xff]
  %v169 = vld [vmem:[#allocation2 + $0x60] sm:$0xff]
  %v170 = vld [vmem:[#allocation2 + $0x68] sm:$0xff]
  %v171 = vld [vmem:[#allocation2 + $0x78] sm:$0xff]
  %v172 = vld [vmem:[#allocation2 + $0x80] sm:$0xff]
  %v173 = vld [vmem:[#allocation2 + $0x90] sm:$0xff]
  %v174 = vld [vmem:[#allocation2 + $0x98] sm:$0xff]
  %v175 = vld [vmem:[#allocation2 + $0xa8] sm:$0xff]
  %v176 = vld [vmem:[#allocation2 + $0xb0] sm:$0xff]
  %v177 = vld [vmem:[#allocation2 + $0xc0] sm:$0xff]
  %v178 = vld [vmem:[#allocation2 + $0xc8] sm:$0xff]
  %v179 = vld [vmem:[#allocation2 + $0xd8] sm:$0xff]
  %v180 = vld [vmem:[#allocation2 + $0xe0] sm:$0xff]
  %v181 = vld [vmem:[#allocation2 + $0xf0] sm:$0xff]
  %v182 = vld [vmem:[#allocation2 + $0xf8] sm:$0xff]
  %v183 = vld [vmem:[#allocation2 + $0x108] sm:$0xff]
  %v184 = vld [vmem:[#allocation2 + $0x110] sm:$0xff]
  %v185 = vld [vmem:[#allocation2 + $0x120] sm:$0xff]
  %v186 = vld [vmem:[#allocation2 + $0x128] sm:$0xff]
  %v187 = vld [vmem:[#allocation2 + $0x138] sm:$0xff]
  %v188 = vld [vmem:[#allocation2 + $0x140] sm:$0xff]
  %v189 = vld [vmem:[#allocation2 + $0x150] sm:$0xff]
  %v190 = vld [vmem:[#allocation2 + $0x158] sm:$0xff]
  %v191 = vld [vmem:[#allocation2 + $0x168] sm:$0xff]
  %v192 = vld [vmem:[#allocation2 + $0x170] sm:$0xff]
  %v193 = vlaneseq
  %v194 = vshrl.u32 %v193, 7
  %v195 = vsub.s32 0, %v194
  %v196 = vrot.slane %v160, %v195
  %v197 = vmul.f32 %v196, %v161
  %v198 = vmul.f32 %v196, %v162
  %v199 = vmul.f32 %v196, %v163
  %v200 = vmul.f32 %v196, %v164
  %v201 = vmul.f32 %v196, %v165
  %v202 = vmul.f32 %v196, %v166
  %v203 = vmul.f32 %v196, %v167
  %v204 = vmul.f32 %v196, %v168
  %v205 = vmul.f32 %v196, %v169
  %v206 = vmul.f32 %v196, %v170
  %v207 = vmul.f32 %v196, %v171
  %v208 = vmul.f32 %v196, %v172
  %v209 = vmul.f32 %v196, %v173
  %v210 = vmul.f32 %v196, %v174
  %v211 = vmul.f32 %v196, %v175
  %v212 = vmul.f32 %v196, %v176
  %v213 = vmul.f32 %v196, %v177
  %v214 = vmul.f32 %v196, %v178
  %v215 = vmul.f32 %v196, %v179
  %v216 = vmul.f32 %v196, %v180
  %v217 = vmul.f32 %v196, %v181
  %v218 = vmul.f32 %v196, %v182
  %v219 = vmul.f32 %v196, %v183
  %v220 = vmul.f32 %v196, %v184
  %v221 = vmul.f32 %v196, %v185
  %v222 = vmul.f32 %v196, %v186
  %v223 = vmul.f32 %v196, %v187
  %v224 = vmul.f32 %v196, %v188
  %v225 = vmul.f32 %v196, %v189
  %v226 = vmul.f32 %v196, %v190
  %v227 = vmul.f32 %v196, %v191
  %v228 = vmul.f32 %v196, %v192
  %v229 = vadd.f32 %v128, %v197
  %v230 = vadd.f32 %v129, %v198
  %v231 = vadd.f32 %v130, %v199
  %v232 = vadd.f32 %v131, %v200
  %v233 = vadd.f32 %v132, %v201
  %v234 = vadd.f32 %v133, %v202
  %v235 = vadd.f32 %v134, %v203
  %v236 = vadd.f32 %v135, %v204
  %v237 = vadd.f32 %v136, %v205
  %v238 = vadd.f32 %v137, %v206
  %v239 = vadd.f32 %v138, %v207
  %v240 = vadd.f32 %v139, %v208
  %v241 = vadd.f32 %v140, %v209
  %v242 = vadd.f32 %v141, %v210
  %v243 = vadd.f32 %v142, %v211
  %v244 = vadd.f32 %v143, %v212
  %v245 = vadd.f32 %v144, %v213
  %v246 = vadd.f32 %v145, %v214
  %v247 = vadd.f32 %v146, %v215
  %v248 = vadd.f32 %v147, %v216
  %v249 = vadd.f32 %v148, %v217
  %v250 = vadd.f32 %v149, %v218
  %v251 = vadd.f32 %v150, %v219
  %v252 = vadd.f32 %v151, %v220
  %v253 = vadd.f32 %v152, %v221
  %v254 = vadd.f32 %v153, %v222
  %v255 = vadd.f32 %v154, %v223
  %v256 = vadd.f32 %v155, %v224
  %v257 = vadd.f32 %v156, %v225
  %v258 = vadd.f32 %v157, %v226
  %v259 = vadd.f32 %v158, %v227
  %v260 = vadd.f32 %v159, %v228
  %v261 = vld [vmem:[%s0 + $0x1] sm:$0x1]
  %v262 = vld [vmem:[#allocation2 + $0x1] sm:$0xff]
  %v263 = vld [vmem:[#allocation2 + $0x9] sm:$0xff]
  %v264 = vld [vmem:[#allocation2 + $0x19] sm:$0xff]
  %v265 = vld [vmem:[#allocation2 + $0x21] sm:$0xff]
  %v266 = vld [vmem:[#allocation2 + $0x31] sm:$0xff]
  %v267 = vld [vmem:[#allocation2 + $0x39] sm:$0xff]
  %v268 = vld [vmem:[#allocation2 + $0x49] sm:$0xff]
  %v269 = vld [vmem:[#allocation2 + $0x51] sm:$0xff]
  %v270 = vld [vmem:[#allocation2 + $0x61] sm:$0xff]
  %v271 = vld [vmem:[#allocation2 + $0x69] sm:$0xff]
  %v272 = vld [vmem:[#allocation2 + $0x79] sm:$0xff]
  %v273 = vld [vmem:[#allocation2 + $0x81] sm:$0xff]
  %v274 = vld [vmem:[#allocation2 + $0x91] sm:$0xff]
  %v275 = vld [vmem:[#allocation2 + $0x99] sm:$0xff]
  %v276 = vld [vmem:[#allocation2 + $0xa9] sm:$0xff]
  %v277 = vld [vmem:[#allocation2 + $0xb1] sm:$0xff]
  %v278 = vld [vmem:[#allocation2 + $0xc1] sm:$0xff]
  %v279 = vld [vmem:[#allocation2 + $0xc9] sm:$0xff]
  %v280 = vld [vmem:[#allocation2 + $0xd9] sm:$0xff]
  %v281 = vld [vmem:[#allocation2 + $0xe1] sm:$0xff]
  %v282 = vld [vmem:[#allocation2 + $0xf1] sm:$0xff]
  %v283 = vld [vmem:[#allocation2 + $0xf9] sm:$0xff]
  %v284 = vld [vmem:[#allocation2 + $0x109] sm:$0xff]
  %v285 = vld [vmem:[#allocation2 + $0x111] sm:$0xff]
  %v286 = vld [vmem:[#allocation2 + $0x121] sm:$0xff]
  %v287 = vld [vmem:[#allocation2 + $0x129] sm:$0xff]
  %v288 = vld [vmem:[#allocation2 + $0x139] sm:$0xff]
  %v289 = vld [vmem:[#allocation2 + $0x141] sm:$0xff]
  %v290 = vld [vmem:[#allocation2 + $0x151] sm:$0xff]
  %v291 = vld [vmem:[#allocation2 + $0x159] sm:$0xff]
  %v292 = vld [vmem:[#allocation2 + $0x169] sm:$0xff]
  %v293 = vld [vmem:[#allocation2 + $0x171] sm:$0xff]
  %v294 = vlaneseq
  %v295 = vshrl.u32 %v294, 7
  %v296 = vsub.s32 0, %v295
  %v297 = vrot.slane %v261, %v296
  %v298 = vmul.f32 %v297, %v262
  %v299 = vmul.f32 %v297, %v263
  %v300 = vmul.f32 %v297, %v264
  %v301 = vmul.f32 %v297, %v265
  %v302 = vmul.f32 %v297, %v266
  %v303 = vmul.f32 %v297, %v267
  %v304 = vmul.f32 %v297, %v268
  %v305 = vmul.f32 %v297, %v269
  %v306 = vmul.f32 %v297, %v270
  %v307 = vmul.f32 %v297, %v271
  %v308 = vmul.f32 %v297, %v272
  %v309 = vmul.f32 %v297, %v273
  %v310 = vmul.f32 %v297, %v274
  %v311 = vmul.f32 %v297, %v275
  %v312 = vmul.f32 %v297, %v276
  %v313 = vmul.f32 %v297, %v277
  %v314 = vmul.f32 %v297, %v278
  %v315 = vmul.f32 %v297, %v279
  %v316 = vmul.f32 %v297, %v280
  %v317 = vmul.f32 %v297, %v281
  %v318 = vmul.f32 %v297, %v282
  %v319 = vmul.f32 %v297, %v283
  %v320 = vmul.f32 %v297, %v284
  %v321 = vmul.f32 %v297, %v285
  %v322 = vmul.f32 %v297, %v286
  %v323 = vmul.f32 %v297, %v287
  %v324 = vmul.f32 %v297, %v288
  %v325 = vmul.f32 %v297, %v289
  %v326 = vmul.f32 %v297, %v290
  %v327 = vmul.f32 %v297, %v291
  %v328 = vmul.f32 %v297, %v292
  %v329 = vmul.f32 %v297, %v293
  %v330 = vadd.f32 %v229, %v298
  %v331 = vadd.f32 %v230, %v299
  %v332 = vadd.f32 %v231, %v300
  %v333 = vadd.f32 %v232, %v301
  %v334 = vadd.f32 %v233, %v302
  %v335 = vadd.f32 %v234, %v303
  %v336 = vadd.f32 %v235, %v304
  %v337 = vadd.f32 %v236, %v305
  %v338 = vadd.f32 %v237, %v306
  %v339 = vadd.f32 %v238, %v307
  %v340 = vadd.f32 %v239, %v308
  %v341 = vadd.f32 %v240, %v309
  %v342 = vadd.f32 %v241, %v310
  %v343 = vadd.f32 %v242, %v311
  %v344 = vadd.f32 %v243, %v312
  %v345 = vadd.f32 %v244, %v313
  %v346 = vadd.f32 %v245, %v314
  %v347 = vadd.f32 %v246, %v315
  %v348 = vadd.f32 %v247, %v316
  %v349 = vadd.f32 %v248, %v317
  %v350 = vadd.f32 %v249, %v318
  %v351 = vadd.f32 %v250, %v319
  %v352 = vadd.f32 %v251, %v320
  %v353 = vadd.f32 %v252, %v321
  %v354 = vadd.f32 %v253, %v322
  %v355 = vadd.f32 %v254, %v323
  %v356 = vadd.f32 %v255, %v324
  %v357 = vadd.f32 %v256, %v325
  %v358 = vadd.f32 %v257, %v326
  %v359 = vadd.f32 %v258, %v327
  %v360 = vadd.f32 %v259, %v328
  %v361 = vadd.f32 %v260, %v329
  %v362 = vld [vmem:[%s0 + $0x2] sm:$0x1]
  %v363 = vld [vmem:[#allocation2 + $0x2] sm:$0xff]
  %v364 = vld [vmem:[#allocation2 + $0xa] sm:$0xff]
  %v365 = vld [vmem:[#allocation2 + $0x1a] sm:$0xff]
  %v366 = vld [vmem:[#allocation2 + $0x22] sm:$0xff]
  %v367 = vld [vmem:[#allocation2 + $0x32] sm:$0xff]
  %v368 = vld [vmem:[#allocation2 + $0x3a] sm:$0xff]
  %v369 = vld [vmem:[#allocation2 + $0x4a] sm:$0xff]
  %v370 = vld [vmem:[#allocation2 + $0x52] sm:$0xff]
  %v371 = vld [vmem:[#allocation2 + $0x62] sm:$0xff]
  %v372 = vld [vmem:[#allocation2 + $0x6a] sm:$0xff]
  %v373 = vld [vmem:[#allocation2 + $0x7a] sm:$0xff]
  %v374 = vld [vmem:[#allocation2 + $0x82] sm:$0xff]
  %v375 = vld [vmem:[#allocation2 + $0x92] sm:$0xff]
  %v376 = vld [vmem:[#allocation2 + $0x9a] sm:$0xff]
  %v377 = vld [vmem:[#allocation2 + $0xaa] sm:$0xff]
  %v378 = vld [vmem:[#allocation2 + $0xb2] sm:$0xff]
  %v379 = vld [vmem:[#allocation2 + $0xc2] sm:$0xff]
  %v380 = vld [vmem:[#allocation2 + $0xca] sm:$0xff]
  %v381 = vld [vmem:[#allocation2 + $0xda] sm:$0xff]
  %v382 = vld [vmem:[#allocation2 + $0xe2] sm:$0xff]
  %v383 = vld [vmem:[#allocation2 + $0xf2] sm:$0xff]
  %v384 = vld [vmem:[#allocation2 + $0xfa] sm:$0xff]
  %v385 = vld [vmem:[#allocation2 + $0x10a] sm:$0xff]
  %v386 = vld [vmem:[#allocation2 + $0x112] sm:$0xff]
  %v387 = vld [vmem:[#allocation2 + $0x122] sm:$0xff]
  %v388 = vld [vmem:[#allocation2 + $0x12a] sm:$0xff]
  %v389 = vld [vmem:[#allocation2 + $0x13a] sm:$0xff]
  %v390 = vld [vmem:[#allocation2 + $0x142] sm:$0xff]
  %v391 = vld [vmem:[#allocation2 + $0x152] sm:$0xff]
  %v392 = vld [vmem:[#allocation2 + $0x15a] sm:$0xff]
  %v393 = vld [vmem:[#allocation2 + $0x16a] sm:$0xff]
  %v394 = vld [vmem:[#allocation2 + $0x172] sm:$0xff]
  %v395 = vlaneseq
  %v396 = vshrl.u32 %v395, 7
  %v397 = vsub.s32 0, %v396
  %v398 = vrot.slane %v362, %v397
  %v399 = vmul.f32 %v398, %v363
  %v400 = vmul.f32 %v398, %v364
  %v401 = vmul.f32 %v398, %v365
  %v402 = vmul.f32 %v398, %v366
  %v403 = vmul.f32 %v398, %v367
  %v404 = vmul.f32 %v398, %v368
  %v405 = vmul.f32 %v398, %v369
  %v406 = vmul.f32 %v398, %v370
  %v407 = vmul.f32 %v398, %v371
  %v408 = vmul.f32 %v398, %v372
  %v409 = vmul.f32 %v398, %v373
  %v410 = vmul.f32 %v398, %v374
  %v411 = vmul.f32 %v398, %v375
  %v412 = vmul.f32 %v398, %v376
  %v413 = vmul.f32 %v398, %v377
  %v414 = vmul.f32 %v398, %v378
  %v415 = vmul.f32 %v398, %v379
  %v416 = vmul.f32 %v398, %v380
  %v417 = vmul.f32 %v398, %v381
  %v418 = vmul.f32 %v398, %v382
  %v419 = vmul.f32 %v398, %v383
  %v420 = vmul.f32 %v398, %v384
  %v421 = vmul.f32 %v398, %v385
  %v422 = vmul.f32 %v398, %v386
  %v423 = vmul.f32 %v398, %v387
  %v424 = vmul.f32 %v398, %v388
  %v425 = vmul.f32 %v398, %v389
  %v426 = vmul.f32 %v398, %v390
  %v427 = vmul.f32 %v398, %v391
  %v428 = vmul.f32 %v398, %v392
  %v429 = vmul.f32 %v398, %v393
  %v430 = vmul.f32 %v398, %v394
  %v431 = vadd.f32 %v330, %v399
  %v432 = vadd.f32 %v331, %v400
  %v433 = vadd.f32 %v332, %v401
  %v434 = vadd.f32 %v333, %v402
  %v435 = vadd.f32 %v334, %v403
  %v436 = vadd.f32 %v335, %v404
  %v437 = vadd.f32 %v336, %v405
  %v438 = vadd.f32 %v337, %v406
  %v439 = vadd.f32 %v338, %v407
  %v440 = vadd.f32 %v339, %v408
  %v441 = vadd.f32 %v340, %v409
  %v442 = vadd.f32 %v341, %v410
  %v443 = vadd.f32 %v342, %v411
  %v444 = vadd.f32 %v343, %v412
  %v445 = vadd.f32 %v344, %v413
  %v446 = vadd.f32 %v345, %v414
  %v447 = vadd.f32 %v346, %v415
  %v448 = vadd.f32 %v347, %v416
  %v449 = vadd.f32 %v348, %v417
  %v450 = vadd.f32 %v349, %v418
  %v451 = vadd.f32 %v350, %v419
  %v452 = vadd.f32 %v351, %v420
  %v453 = vadd.f32 %v352, %v421
  %v454 = vadd.f32 %v353, %v422
  %v455 = vadd.f32 %v354, %v423
  %v456 = vadd.f32 %v355, %v424
  %v457 = vadd.f32 %v356, %v425
  %v458 = vadd.f32 %v357, %v426
  %v459 = vadd.f32 %v358, %v427
  %v460 = vadd.f32 %v359, %v428
  %v461 = vadd.f32 %v360, %v429
  %v462 = vadd.f32 %v361, %v430
  %v463 = vld [vmem:[%s0 + $0x3] sm:$0x1]
  %v464 = vld [vmem:[%s55] sm:$0xff]
  %v465 = vld [vmem:[%s55 + $0x8] sm:$0xff]
  %v466 = vld [vmem:[%s55 + $0x18] sm:$0xff]
  %v467 = vld [vmem:[%s55 + $0x20] sm:$0xff]
  %v468 = vld [vmem:[%s55 + $0x30] sm:$0xff]
  %v469 = vld [vmem:[%s55 + $0x38] sm:$0xff]
  %v470 = vld [vmem:[%s55 + $0x48] sm:$0xff]
  %v471 = vld [vmem:[%s55 + $0x50] sm:$0xff]
  %v472 = vld [vmem:[%s55 + $0x60] sm:$0xff]
  %v473 = vld [vmem:[%s55 + $0x68] sm:$0xff]
  %v474 = vld [vmem:[%s55 + $0x78] sm:$0xff]
  %v475 = vld [vmem:[%s55 + $0x80] sm:$0xff]
  %v476 = vld [vmem:[%s55 + $0x90] sm:$0xff]
  %v477 = vld [vmem:[%s55 + $0x98] sm:$0xff]
  %v478 = vld [vmem:[%s55 + $0xa8] sm:$0xff]
  %v479 = vld [vmem:[%s55 + $0xb0] sm:$0xff]
  %v480 = vld [vmem:[%s55 + $0xc0] sm:$0xff]
  %v481 = vld [vmem:[%s55 + $0xc8] sm:$0xff]
  %v482 = vld [vmem:[%s55 + $0xd8] sm:$0xff]
  %v483 = vld [vmem:[%s55 + $0xe0] sm:$0xff]
  %v484 = vld [vmem:[%s55 + $0xf0] sm:$0xff]
  %v485 = vld [vmem:[%s55 + $0xf8] sm:$0xff]
  %v486 = vld [vmem:[%s55 + $0x108] sm:$0xff]
  %v487 = vld [vmem:[%s55 + $0x110] sm:$0xff]
  %v488 = vld [vmem:[%s55 + $0x120] sm:$0xff]
  %v489 = vld [vmem:[%s55 + $0x128] sm:$0xff]
  %v490 = vld [vmem:[%s55 + $0x138] sm:$0xff]
  %v491 = vld [vmem:[%s55 + $0x140] sm:$0xff]
  %v492 = vld [vmem:[%s55 + $0x150] sm:$0xff]
  %v493 = vld [vmem:[%s55 + $0x158] sm:$0xff]
  %v494 = vld [vmem:[%s55 + $0x168] sm:$0xff]
  %v495 = vld [vmem:[%s55 + $0x170] sm:$0xff]
  %v496 = vlaneseq
  %v497 = vshrl.u32 %v496, 7
  %v498 = vsub.s32 0, %v497
  %v499 = vrot.slane %v463, %v498
  %v500 = vmul.f32 %v499, %v464
  %v501 = vmul.f32 %v499, %v465
  %v502 = vmul.f32 %v499, %v466
  %v503 = vmul.f32 %v499, %v467
  %v504 = vmul.f32 %v499, %v468
  %v505 = vmul.f32 %v499, %v469
  %v506 = vmul.f32 %v499, %v470
  %v507 = vmul.f32 %v499, %v471
  %v508 = vmul.f32 %v499, %v472
  %v509 = vmul.f32 %v499, %v473
  %v510 = vmul.f32 %v499, %v474
  %v511 = vmul.f32 %v499, %v475
  %v512 = vmul.f32 %v499, %v476
  %v513 = vmul.f32 %v499, %v477
  %v514 = vmul.f32 %v499, %v478
  %v515 = vmul.f32 %v499, %v479
  %v516 = vmul.f32 %v499, %v480
  %v517 = vmul.f32 %v499, %v481
  %v518 = vmul.f32 %v499, %v482
  %v519 = vmul.f32 %v499, %v483
  %v520 = vmul.f32 %v499, %v484
  %v521 = vmul.f32 %v499, %v485
  %v522 = vmul.f32 %v499, %v486
  %v523 = vmul.f32 %v499, %v487
  %v524 = vmul.f32 %v499, %v488
  %v525 = vmul.f32 %v499, %v489
  %v526 = vmul.f32 %v499, %v490
  %v527 = vmul.f32 %v499, %v491
  %v528 = vmul.f32 %v499, %v492
  %v529 = vmul.f32 %v499, %v493
  %v530 = vmul.f32 %v499, %v494
  %v531 = vmul.f32 %v499, %v495
  %v532 = vadd.f32 %v431, %v500
  %v533 = vadd.f32 %v432, %v501
  %v534 = vadd.f32 %v433, %v502
  %v535 = vadd.f32 %v434, %v503
  %v536 = vadd.f32 %v435, %v504
  %v537 = vadd.f32 %v436, %v505
  %v538 = vadd.f32 %v437, %v506
  %v539 = vadd.f32 %v438, %v507
  %v540 = vadd.f32 %v439, %v508
  %v541 = vadd.f32 %v440, %v509
  %v542 = vadd.f32 %v441, %v510
  %v543 = vadd.f32 %v442, %v511
  %v544 = vadd.f32 %v443, %v512
  %v545 = vadd.f32 %v444, %v513
  %v546 = vadd.f32 %v445, %v514
  %v547 = vadd.f32 %v446, %v515
  %v548 = vadd.f32 %v447, %v516
  %v549 = vadd.f32 %v448, %v517
  %v550 = vadd.f32 %v449, %v518
  %v551 = vadd.f32 %v450, %v519
  %v552 = vadd.f32 %v451, %v520
  %v553 = vadd.f32 %v452, %v521
  %v554 = vadd.f32 %v453, %v522
  %v555 = vadd.f32 %v454, %v523
  %v556 = vadd.f32 %v455, %v524
  %v557 = vadd.f32 %v456, %v525
  %v558 = vadd.f32 %v457, %v526
  %v559 = vadd.f32 %v458, %v527
  %v560 = vadd.f32 %v459, %v528
  %v561 = vadd.f32 %v460, %v529
  %v562 = vadd.f32 %v461, %v530
  %v563 = vadd.f32 %v462, %v531
  %v564 = vld [vmem:[%s0 + $0x4] sm:$0x1]
  %v565 = vld [vmem:[%s55 + $0x1] sm:$0xff]
  %v566 = vld [vmem:[%s55 + $0x9] sm:$0xff]
  %v567 = vld [vmem:[%s55 + $0x19] sm:$0xff]
  %v568 = vld [vmem:[%s55 + $0x21] sm:$0xff]
  %v569 = vld [vmem:[%s55 + $0x31] sm:$0xff]
  %v570 = vld [vmem:[%s55 + $0x39] sm:$0xff]
  %v571 = vld [vmem:[%s55 + $0x49] sm:$0xff]
  %v572 = vld [vmem:[%s55 + $0x51] sm:$0xff]
  %v573 = vld [vmem:[%s55 + $0x61] sm:$0xff]
  %v574 = vld [vmem:[%s55 + $0x69] sm:$0xff]
  %v575 = vld [vmem:[%s55 + $0x79] sm:$0xff]
  %v576 = vld [vmem:[%s55 + $0x81] sm:$0xff]
  %v577 = vld [vmem:[%s55 + $0x91] sm:$0xff]
  %v578 = vld [vmem:[%s55 + $0x99] sm:$0xff]
  %v579 = vld [vmem:[%s55 + $0xa9] sm:$0xff]
  %v580 = vld [vmem:[%s55 + $0xb1] sm:$0xff]
  %v581 = vld [vmem:[%s55 + $0xc1] sm:$0xff]
  %v582 = vld [vmem:[%s55 + $0xc9] sm:$0xff]
  %v583 = vld [vmem:[%s55 + $0xd9] sm:$0xff]
  %v584 = vld [vmem:[%s55 + $0xe1] sm:$0xff]
  %v585 = vld [vmem:[%s55 + $0xf1] sm:$0xff]
  %v586 = vld [vmem:[%s55 + $0xf9] sm:$0xff]
  %v587 = vld [vmem:[%s55 + $0x109] sm:$0xff]
  %v588 = vld [vmem:[%s55 + $0x111] sm:$0xff]
  %v589 = vld [vmem:[%s55 + $0x121] sm:$0xff]
  %v590 = vld [vmem:[%s55 + $0x129] sm:$0xff]
  %v591 = vld [vmem:[%s55 + $0x139] sm:$0xff]
  %v592 = vld [vmem:[%s55 + $0x141] sm:$0xff]
  %v593 = vld [vmem:[%s55 + $0x151] sm:$0xff]
  %v594 = vld [vmem:[%s55 + $0x159] sm:$0xff]
  %v595 = vld [vmem:[%s55 + $0x169] sm:$0xff]
  %v596 = vld [vmem:[%s55 + $0x171] sm:$0xff]
  %v597 = vlaneseq
  %v598 = vshrl.u32 %v597, 7
  %v599 = vsub.s32 0, %v598
  %v600 = vrot.slane %v564, %v599
  %v601 = vmul.f32 %v600, %v565
  %v602 = vmul.f32 %v600, %v566
  %v603 = vmul.f32 %v600, %v567
  %v604 = vmul.f32 %v600, %v568
  %v605 = vmul.f32 %v600, %v569
  %v606 = vmul.f32 %v600, %v570
  %v607 = vmul.f32 %v600, %v571
  %v608 = vmul.f32 %v600, %v572
  %v609 = vmul.f32 %v600, %v573
  %v610 = vmul.f32 %v600, %v574
  %v611 = vmul.f32 %v600, %v575
  %v612 = vmul.f32 %v600, %v576
  %v613 = vmul.f32 %v600, %v577
  %v614 = vmul.f32 %v600, %v578
  %v615 = vmul.f32 %v600, %v579
  %v616 = vmul.f32 %v600, %v580
  %v617 = vmul.f32 %v600, %v581
  %v618 = vmul.f32 %v600, %v582
  %v619 = vmul.f32 %v600, %v583
  %v620 = vmul.f32 %v600, %v584
  %v621 = vmul.f32 %v600, %v585
  %v622 = vmul.f32 %v600, %v586
  %v623 = vmul.f32 %v600, %v587
  %v624 = vmul.f32 %v600, %v588
  %v625 = vmul.f32 %v600, %v589
  %v626 = vmul.f32 %v600, %v590
  %v627 = vmul.f32 %v600, %v591
  %v628 = vmul.f32 %v600, %v592
  %v629 = vmul.f32 %v600, %v593
  %v630 = vmul.f32 %v600, %v594
  %v631 = vmul.f32 %v600, %v595
  %v632 = vmul.f32 %v600, %v596
  %v633 = vadd.f32 %v532, %v601
  %v634 = vadd.f32 %v533, %v602
  %v635 = vadd.f32 %v534, %v603
  %v636 = vadd.f32 %v535, %v604
  %v637 = vadd.f32 %v536, %v605
  %v638 = vadd.f32 %v537, %v606
  %v639 = vadd.f32 %v538, %v607
  %v640 = vadd.f32 %v539, %v608
  %v641 = vadd.f32 %v540, %v609
  %v642 = vadd.f32 %v541, %v610
  %v643 = vadd.f32 %v542, %v611
  %v644 = vadd.f32 %v543, %v612
  %v645 = vadd.f32 %v544, %v613
  %v646 = vadd.f32 %v545, %v614
  %v647 = vadd.f32 %v546, %v615
  %v648 = vadd.f32 %v547, %v616
  %v649 = vadd.f32 %v548, %v617
  %v650 = vadd.f32 %v549, %v618
  %v651 = vadd.f32 %v550, %v619
  %v652 = vadd.f32 %v551, %v620
  %v653 = vadd.f32 %v552, %v621
  %v654 = vadd.f32 %v553, %v622
  %v655 = vadd.f32 %v554, %v623
  %v656 = vadd.f32 %v555, %v624
  %v657 = vadd.f32 %v556, %v625
  %v658 = vadd.f32 %v557, %v626
  %v659 = vadd.f32 %v558, %v627
  %v660 = vadd.f32 %v559, %v628
  %v661 = vadd.f32 %v560, %v629
  %v662 = vadd.f32 %v561, %v630
  %v663 = vadd.f32 %v562, %v631
  %v664 = vadd.f32 %v563, %v632
  %v665 = vld [vmem:[%s0 + $0x5] sm:$0x1]
  %v666 = vld [vmem:[%s55 + $0x2] sm:$0xff]
  %v667 = vld [vmem:[%s55 + $0xa] sm:$0xff]
  %v668 = vld [vmem:[%s55 + $0x1a] sm:$0xff]
  %v669 = vld [vmem:[%s55 + $0x22] sm:$0xff]
  %v670 = vld [vmem:[%s55 + $0x32] sm:$0xff]
  %v671 = vld [vmem:[%s55 + $0x3a] sm:$0xff]
  %v672 = vld [vmem:[%s55 + $0x4a] sm:$0xff]
  %v673 = vld [vmem:[%s55 + $0x52] sm:$0xff]
  %v674 = vld [vmem:[%s55 + $0x62] sm:$0xff]
  %v675 = vld [vmem:[%s55 + $0x6a] sm:$0xff]
  %v676 = vld [vmem:[%s55 + $0x7a] sm:$0xff]
  %v677 = vld [vmem:[%s55 + $0x82] sm:$0xff]
  %v678 = vld [vmem:[%s55 + $0x92] sm:$0xff]
  %v679 = vld [vmem:[%s55 + $0x9a] sm:$0xff]
  %v680 = vld [vmem:[%s55 + $0xaa] sm:$0xff]
  %v681 = vld [vmem:[%s55 + $0xb2] sm:$0xff]
  %v682 = vld [vmem:[%s55 + $0xc2] sm:$0xff]
  %v683 = vld [vmem:[%s55 + $0xca] sm:$0xff]
  %v684 = vld [vmem:[%s55 + $0xda] sm:$0xff]
  %v685 = vld [vmem:[%s55 + $0xe2] sm:$0xff]
  %v686 = vld [vmem:[%s55 + $0xf2] sm:$0xff]
  %v687 = vld [vmem:[%s55 + $0xfa] sm:$0xff]
  %v688 = vld [vmem:[%s55 + $0x10a] sm:$0xff]
  %v689 = vld [vmem:[%s55 + $0x112] sm:$0xff]
  %v690 = vld [vmem:[%s55 + $0x122] sm:$0xff]
  %v691 = vld [vmem:[%s55 + $0x12a] sm:$0xff]
  %v692 = vld [vmem:[%s55 + $0x13a] sm:$0xff]
  %v693 = vld [vmem:[%s55 + $0x142] sm:$0xff]
  %v694 = vld [vmem:[%s55 + $0x152] sm:$0xff]
  %v695 = vld [vmem:[%s55 + $0x15a] sm:$0xff]
  %v696 = vld [vmem:[%s55 + $0x16a] sm:$0xff]
  %v697 = vld [vmem:[%s55 + $0x172] sm:$0xff]
  %v698 = vlaneseq
  %v699 = vshrl.u32 %v698, 7
  %v700 = vsub.s32 0, %v699
  %v701 = vrot.slane %v665, %v700
  %v702 = vmul.f32 %v701, %v666
  %v703 = vmul.f32 %v701, %v667
  %v704 = vmul.f32 %v701, %v668
  %v705 = vmul.f32 %v701, %v669
  %v706 = vmul.f32 %v701, %v670
  %v707 = vmul.f32 %v701, %v671
  %v708 = vmul.f32 %v701, %v672
  %v709 = vmul.f32 %v701, %v673
  %v710 = vmul.f32 %v701, %v674
  %v711 = vmul.f32 %v701, %v675
  %v712 = vmul.f32 %v701, %v676
  %v713 = vmul.f32 %v701, %v677
  %v714 = vmul.f32 %v701, %v678
  %v715 = vmul.f32 %v701, %v679
  %v716 = vmul.f32 %v701, %v680
  %v717 = vmul.f32 %v701, %v681
  %v718 = vmul.f32 %v701, %v682
  %v719 = vmul.f32 %v701, %v683
  %v720 = vmul.f32 %v701, %v684
  %v721 = vmul.f32 %v701, %v685
  %v722 = vmul.f32 %v701, %v686
  %v723 = vmul.f32 %v701, %v687
  %v724 = vmul.f32 %v701, %v688
  %v725 = vmul.f32 %v701, %v689
  %v726 = vmul.f32 %v701, %v690
  %v727 = vmul.f32 %v701, %v691
  %v728 = vmul.f32 %v701, %v692
  %v729 = vmul.f32 %v701, %v693
  %v730 = vmul.f32 %v701, %v694
  %v731 = vmul.f32 %v701, %v695
  %v732 = vmul.f32 %v701, %v696
  %v733 = vmul.f32 %v701, %v697
  %v734 = vadd.f32 %v633, %v702
  %v735 = vadd.f32 %v634, %v703
  %v736 = vadd.f32 %v635, %v704
  %v737 = vadd.f32 %v636, %v705
  %v738 = vadd.f32 %v637, %v706
  %v739 = vadd.f32 %v638, %v707
  %v740 = vadd.f32 %v639, %v708
  %v741 = vadd.f32 %v640, %v709
  %v742 = vadd.f32 %v641, %v710
  %v743 = vadd.f32 %v642, %v711
  %v744 = vadd.f32 %v643, %v712
  %v745 = vadd.f32 %v644, %v713
  %v746 = vadd.f32 %v645, %v714
  %v747 = vadd.f32 %v646, %v715
  %v748 = vadd.f32 %v647, %v716
  %v749 = vadd.f32 %v648, %v717
  %v750 = vadd.f32 %v649, %v718
  %v751 = vadd.f32 %v650, %v719
  %v752 = vadd.f32 %v651, %v720
  %v753 = vadd.f32 %v652, %v721
  %v754 = vadd.f32 %v653, %v722
  %v755 = vadd.f32 %v654, %v723
  %v756 = vadd.f32 %v655, %v724
  %v757 = vadd.f32 %v656, %v725
  %v758 = vadd.f32 %v657, %v726
  %v759 = vadd.f32 %v658, %v727
  %v760 = vadd.f32 %v659, %v728
  %v761 = vadd.f32 %v660, %v729
  %v762 = vadd.f32 %v661, %v730
  %v763 = vadd.f32 %v662, %v731
  %v764 = vadd.f32 %v663, %v732
  %v765 = vadd.f32 %v664, %v733
  %v766 = vld [vmem:[%s0 + $0x6] sm:$0x1]
  %s767 = scalar_lea.vmem [#allocation2], 48
  %v768 = vld [vmem:[%s767] sm:$0xff]
  %v769 = vld [vmem:[%s767 + $0x8] sm:$0xff]
  %v770 = vld [vmem:[%s767 + $0x18] sm:$0xff]
  %v771 = vld [vmem:[%s767 + $0x20] sm:$0xff]
  %v772 = vld [vmem:[%s767 + $0x30] sm:$0xff]
  %v773 = vld [vmem:[%s767 + $0x38] sm:$0xff]
  %v774 = vld [vmem:[%s767 + $0x48] sm:$0xff]
  %v775 = vld [vmem:[%s767 + $0x50] sm:$0xff]
  %v776 = vld [vmem:[%s767 + $0x60] sm:$0xff]
  %v777 = vld [vmem:[%s767 + $0x68] sm:$0xff]
  %v778 = vld [vmem:[%s767 + $0x78] sm:$0xff]
  %v779 = vld [vmem:[%s767 + $0x80] sm:$0xff]
  %v780 = vld [vmem:[%s767 + $0x90] sm:$0xff]
  %v781 = vld [vmem:[%s767 + $0x98] sm:$0xff]
  %v782 = vld [vmem:[%s767 + $0xa8] sm:$0xff]
  %v783 = vld [vmem:[%s767 + $0xb0] sm:$0xff]
  %v784 = vld [vmem:[%s767 + $0xc0] sm:$0xff]
  %v785 = vld [vmem:[%s767 + $0xc8] sm:$0xff]
  %v786 = vld [vmem:[%s767 + $0xd8] sm:$0xff]
  %v787 = vld [vmem:[%s767 + $0xe0] sm:$0xff]
  %v788 = vld [vmem:[%s767 + $0xf0] sm:$0xff]
  %v789 = vld [vmem:[%s767 + $0xf8] sm:$0xff]
  %v790 = vld [vmem:[%s767 + $0x108] sm:$0xff]
  %v791 = vld [vmem:[%s767 + $0x110] sm:$0xff]
  %v792 = vld [vmem:[%s767 + $0x120] sm:$0xff]
  %v793 = vld [vmem:[%s767 + $0x128] sm:$0xff]
  %v794 = vld [vmem:[%s767 + $0x138] sm:$0xff]
  %v795 = vld [vmem:[%s767 + $0x140] sm:$0xff]
  %v796 = vld [vmem:[%s767 + $0x150] sm:$0xff]
  %v797 = vld [vmem:[%s767 + $0x158] sm:$0xff]
  %v798 = vld [vmem:[%s767 + $0x168] sm:$0xff]
  %v799 = vld [vmem:[%s767 + $0x170] sm:$0xff]
  %v800 = vlaneseq
  %v801 = vshrl.u32 %v800, 7
  %v802 = vsub.s32 0, %v801
  %v803 = vrot.slane %v766, %v802
  %v804 = vmul.f32 %v803, %v768
  %v805 = vmul.f32 %v803, %v769
  %v806 = vmul.f32 %v803, %v770
  %v807 = vmul.f32 %v803, %v771
  %v808 = vmul.f32 %v803, %v772
  %v809 = vmul.f32 %v803, %v773
  %v810 = vmul.f32 %v803, %v774
  %v811 = vmul.f32 %v803, %v775
  %v812 = vmul.f32 %v803, %v776
  %v813 = vmul.f32 %v803, %v777
  %v814 = vmul.f32 %v803, %v778
  %v815 = vmul.f32 %v803, %v779
  %v816 = vmul.f32 %v803, %v780
  %v817 = vmul.f32 %v803, %v781
  %v818 = vmul.f32 %v803, %v782
  %v819 = vmul.f32 %v803, %v783
  %v820 = vmul.f32 %v803, %v784
  %v821 = vmul.f32 %v803, %v785
  %v822 = vmul.f32 %v803, %v786
  %v823 = vmul.f32 %v803, %v787
  %v824 = vmul.f32 %v803, %v788
  %v825 = vmul.f32 %v803, %v789
  %v826 = vmul.f32 %v803, %v790
  %v827 = vmul.f32 %v803, %v791
  %v828 = vmul.f32 %v803, %v792
  %v829 = vmul.f32 %v803, %v793
  %v830 = vmul.f32 %v803, %v794
  %v831 = vmul.f32 %v803, %v795
  %v832 = vmul.f32 %v803, %v796
  %v833 = vmul.f32 %v803, %v797
  %v834 = vmul.f32 %v803, %v798
  %v835 = vmul.f32 %v803, %v799
  %v836 = vadd.f32 %v734, %v804
  %v837 = vadd.f32 %v735, %v805
  %v838 = vadd.f32 %v736, %v806
  %v839 = vadd.f32 %v737, %v807
  %v840 = vadd.f32 %v738, %v808
  %v841 = vadd.f32 %v739, %v809
  %v842 = vadd.f32 %v740, %v810
  %v843 = vadd.f32 %v741, %v811
  %v844 = vadd.f32 %v742, %v812
  %v845 = vadd.f32 %v743, %v813
  %v846 = vadd.f32 %v744, %v814
  %v847 = vadd.f32 %v745, %v815
  %v848 = vadd.f32 %v746, %v816
  %v849 = vadd.f32 %v747, %v817
  %v850 = vadd.f32 %v748, %v818
  %v851 = vadd.f32 %v749, %v819
  %v852 = vadd.f32 %v750, %v820
  %v853 = vadd.f32 %v751, %v821
  %v854 = vadd.f32 %v752, %v822
  %v855 = vadd.f32 %v753, %v823
  %v856 = vadd.f32 %v754, %v824
  %v857 = vadd.f32 %v755, %v825
  %v858 = vadd.f32 %v756, %v826
  %v859 = vadd.f32 %v757, %v827
  %v860 = vadd.f32 %v758, %v828
  %v861 = vadd.f32 %v759, %v829
  %v862 = vadd.f32 %v760, %v830
  %v863 = vadd.f32 %v761, %v831
  %v864 = vadd.f32 %v762, %v832
  %v865 = vadd.f32 %v763, %v833
  %v866 = vadd.f32 %v764, %v834
  %v867 = vadd.f32 %v765, %v835
  %v868 = vld [vmem:[%s0 + $0x7] sm:$0x1]
  %v869 = vld [vmem:[%s767 + $0x1] sm:$0xff]
  %v870 = vld [vmem:[%s767 + $0x9] sm:$0xff]
  %v871 = vld [vmem:[%s767 + $0x19] sm:$0xff]
  %v872 = vld [vmem:[%s767 + $0x21] sm:$0xff]
  %v873 = vld [vmem:[%s767 + $0x31] sm:$0xff]
  %v874 = vld [vmem:[%s767 + $0x39] sm:$0xff]
  %v875 = vld [vmem:[%s767 + $0x49] sm:$0xff]
  %v876 = vld [vmem:[%s767 + $0x51] sm:$0xff]
  %v877 = vld [vmem:[%s767 + $0x61] sm:$0xff]
  %v878 = vld [vmem:[%s767 + $0x69] sm:$0xff]
  %v879 = vld [vmem:[%s767 + $0x79] sm:$0xff]
  %v880 = vld [vmem:[%s767 + $0x81] sm:$0xff]
  %v881 = vld [vmem:[%s767 + $0x91] sm:$0xff]
  %v882 = vld [vmem:[%s767 + $0x99] sm:$0xff]
  %v883 = vld [vmem:[%s767 + $0xa9] sm:$0xff]
  %v884 = vld [vmem:[%s767 + $0xb1] sm:$0xff]
  %v885 = vld [vmem:[%s767 + $0xc1] sm:$0xff]
  %v886 = vld [vmem:[%s767 + $0xc9] sm:$0xff]
  %v887 = vld [vmem:[%s767 + $0xd9] sm:$0xff]
  %v888 = vld [vmem:[%s767 + $0xe1] sm:$0xff]
  %v889 = vld [vmem:[%s767 + $0xf1] sm:$0xff]
  %v890 = vld [vmem:[%s767 + $0xf9] sm:$0xff]
  %v891 = vld [vmem:[%s767 + $0x109] sm:$0xff]
  %v892 = vld [vmem:[%s767 + $0x111] sm:$0xff]
  %v893 = vld [vmem:[%s767 + $0x121] sm:$0xff]
  %v894 = vld [vmem:[%s767 + $0x129] sm:$0xff]
  %v895 = vld [vmem:[%s767 + $0x139] sm:$0xff]
  %v896 = vld [vmem:[%s767 + $0x141] sm:$0xff]
  %v897 = vld [vmem:[%s767 + $0x151] sm:$0xff]
  %v898 = vld [vmem:[%s767 + $0x159] sm:$0xff]
  %v899 = vld [vmem:[%s767 + $0x169] sm:$0xff]
  %v900 = vld [vmem:[%s767 + $0x171] sm:$0xff]
  %v901 = vlaneseq
  %v902 = vshrl.u32 %v901, 7
  %v903 = vsub.s32 0, %v902
  %v904 = vrot.slane %v868, %v903
  %v905 = vmul.f32 %v904, %v869
  %v906 = vmul.f32 %v904, %v870
  %v907 = vmul.f32 %v904, %v871
  %v908 = vmul.f32 %v904, %v872
  %v909 = vmul.f32 %v904, %v873
  %v910 = vmul.f32 %v904, %v874
  %v911 = vmul.f32 %v904, %v875
  %v912 = vmul.f32 %v904, %v876
  %v913 = vmul.f32 %v904, %v877
  %v914 = vmul.f32 %v904, %v878
  %v915 = vmul.f32 %v904, %v879
  %v916 = vmul.f32 %v904, %v880
  %v917 = vmul.f32 %v904, %v881
  %v918 = vmul.f32 %v904, %v882
  %v919 = vmul.f32 %v904, %v883
  %v920 = vmul.f32 %v904, %v884
  %v921 = vmul.f32 %v904, %v885
  %v922 = vmul.f32 %v904, %v886
  %v923 = vmul.f32 %v904, %v887
  %v924 = vmul.f32 %v904, %v888
  %v925 = vmul.f32 %v904, %v889
  %v926 = vmul.f32 %v904, %v890
  %v927 = vmul.f32 %v904, %v891
  %v928 = vmul.f32 %v904, %v892
  %v929 = vmul.f32 %v904, %v893
  %v930 = vmul.f32 %v904, %v894
  %v931 = vmul.f32 %v904, %v895
  %v932 = vmul.f32 %v904, %v896
  %v933 = vmul.f32 %v904, %v897
  %v934 = vmul.f32 %v904, %v898
  %v935 = vmul.f32 %v904, %v899
  %v936 = vmul.f32 %v904, %v900
  %v937 = vadd.f32 %v836, %v905
  %v938 = vadd.f32 %v837, %v906
  %v939 = vadd.f32 %v838, %v907
  %v940 = vadd.f32 %v839, %v908
  %v941 = vadd.f32 %v840, %v909
  %v942 = vadd.f32 %v841, %v910
  %v943 = vadd.f32 %v842, %v911
  %v944 = vadd.f32 %v843, %v912
  %v945 = vadd.f32 %v844, %v913
  %v946 = vadd.f32 %v845, %v914
  %v947 = vadd.f32 %v846, %v915
  %v948 = vadd.f32 %v847, %v916
  %v949 = vadd.f32 %v848, %v917
  %v950 = vadd.f32 %v849, %v918
  %v951 = vadd.f32 %v850, %v919
  %v952 = vadd.f32 %v851, %v920
  %v953 = vadd.f32 %v852, %v921
  %v954 = vadd.f32 %v853, %v922
  %v955 = vadd.f32 %v854, %v923
  %v956 = vadd.f32 %v855, %v924
  %v957 = vadd.f32 %v856, %v925
  %v958 = vadd.f32 %v857, %v926
  %v959 = vadd.f32 %v858, %v927
  %v960 = vadd.f32 %v859, %v928
  %v961 = vadd.f32 %v860, %v929
  %v962 = vadd.f32 %v861, %v930
  %v963 = vadd.f32 %v862, %v931
  %v964 = vadd.f32 %v863, %v932
  %v965 = vadd.f32 %v864, %v933
  %v966 = vadd.f32 %v865, %v934
  %v967 = vadd.f32 %v866, %v935
  %v968 = vadd.f32 %v867, %v936
  %v969 = vld [vmem:[%s0 + $0x8] sm:$0x1]
  %v970 = vld [vmem:[%s767 + $0x2] sm:$0xff]
  %v971 = vld [vmem:[%s767 + $0xa] sm:$0xff]
  %v972 = vld [vmem:[%s767 + $0x1a] sm:$0xff]
  %v973 = vld [vmem:[%s767 + $0x22] sm:$0xff]
  %v974 = vld [vmem:[%s767 + $0x32] sm:$0xff]
  %v975 = vld [vmem:[%s767 + $0x3a] sm:$0xff]
  %v976 = vld [vmem:[%s767 + $0x4a] sm:$0xff]
  %v977 = vld [vmem:[%s767 + $0x52] sm:$0xff]
  %v978 = vld [vmem:[%s767 + $0x62] sm:$0xff]
  %v979 = vld [vmem:[%s767 + $0x6a] sm:$0xff]
  %v980 = vld [vmem:[%s767 + $0x7a] sm:$0xff]
  %v981 = vld [vmem:[%s767 + $0x82] sm:$0xff]
  %v982 = vld [vmem:[%s767 + $0x92] sm:$0xff]
  %v983 = vld [vmem:[%s767 + $0x9a] sm:$0xff]
  %v984 = vld [vmem:[%s767 + $0xaa] sm:$0xff]
  %v985 = vld [vmem:[%s767 + $0xb2] sm:$0xff]
  %v986 = vld [vmem:[%s767 + $0xc2] sm:$0xff]
  %v987 = vld [vmem:[%s767 + $0xca] sm:$0xff]
  %v988 = vld [vmem:[%s767 + $0xda] sm:$0xff]
  %v989 = vld [vmem:[%s767 + $0xe2] sm:$0xff]
  %v990 = vld [vmem:[%s767 + $0xf2] sm:$0xff]
  %v991 = vld [vmem:[%s767 + $0xfa] sm:$0xff]
  %v992 = vld [vmem:[%s767 + $0x10a] sm:$0xff]
  %v993 = vld [vmem:[%s767 + $0x112] sm:$0xff]
  %v994 = vld [vmem:[%s767 + $0x122] sm:$0xff]
  %v995 = vld [vmem:[%s767 + $0x12a] sm:$0xff]
  %v996 = vld [vmem:[%s767 + $0x13a] sm:$0xff]
  %v997 = vld [vmem:[%s767 + $0x142] sm:$0xff]
  %v998 = vld [vmem:[%s767 + $0x152] sm:$0xff]
  %v999 = vld [vmem:[%s767 + $0x15a] sm:$0xff]
  %v1000 = vld [vmem:[%s767 + $0x16a] sm:$0xff]
  %v1001 = vld [vmem:[%s767 + $0x172] sm:$0xff]
  %v1002 = vlaneseq
  %v1003 = vshrl.u32 %v1002, 7
  %v1004 = vsub.s32 0, %v1003
  %v1005 = vrot.slane %v969, %v1004
  %v1006 = vmul.f32 %v1005, %v970
  %v1007 = vmul.f32 %v1005, %v971
  %v1008 = vmul.f32 %v1005, %v972
  %v1009 = vmul.f32 %v1005, %v973
  %v1010 = vmul.f32 %v1005, %v974
  %v1011 = vmul.f32 %v1005, %v975
  %v1012 = vmul.f32 %v1005, %v976
  %v1013 = vmul.f32 %v1005, %v977
  %v1014 = vmul.f32 %v1005, %v978
  %v1015 = vmul.f32 %v1005, %v979
  %v1016 = vmul.f32 %v1005, %v980
  %v1017 = vmul.f32 %v1005, %v981
  %v1018 = vmul.f32 %v1005, %v982
  %v1019 = vmul.f32 %v1005, %v983
  %v1020 = vmul.f32 %v1005, %v984
  %v1021 = vmul.f32 %v1005, %v985
  %v1022 = vmul.f32 %v1005, %v986
  %v1023 = vmul.f32 %v1005, %v987
  %v1024 = vmul.f32 %v1005, %v988
  %v1025 = vmul.f32 %v1005, %v989
  %v1026 = vmul.f32 %v1005, %v990
  %v1027 = vmul.f32 %v1005, %v991
  %v1028 = vmul.f32 %v1005, %v992
  %v1029 = vmul.f32 %v1005, %v993
  %v1030 = vmul.f32 %v1005, %v994
  %v1031 = vmul.f32 %v1005, %v995
  %v1032 = vmul.f32 %v1005, %v996
  %v1033 = vmul.f32 %v1005, %v997
  %v1034 = vmul.f32 %v1005, %v998
  %v1035 = vmul.f32 %v1005, %v999
  %v1036 = vmul.f32 %v1005, %v1000
  %v1037 = vmul.f32 %v1005, %v1001
  %v1038 = vadd.f32 %v937, %v1006
  %v1039 = vadd.f32 %v938, %v1007
  %v1040 = vadd.f32 %v939, %v1008
  %v1041 = vadd.f32 %v940, %v1009
  %v1042 = vadd.f32 %v941, %v1010
  %v1043 = vadd.f32 %v942, %v1011
  %v1044 = vadd.f32 %v943, %v1012
  %v1045 = vadd.f32 %v944, %v1013
  %v1046 = vadd.f32 %v945, %v1014
  %v1047 = vadd.f32 %v946, %v1015
  %v1048 = vadd.f32 %v947, %v1016
  %v1049 = vadd.f32 %v948, %v1017
  %v1050 = vadd.f32 %v949, %v1018
  %v1051 = vadd.f32 %v950, %v1019
  %v1052 = vadd.f32 %v951, %v1020
  %v1053 = vadd.f32 %v952, %v1021
  %v1054 = vadd.f32 %v953, %v1022
  %v1055 = vadd.f32 %v954, %v1023
  %v1056 = vadd.f32 %v955, %v1024
  %v1057 = vadd.f32 %v956, %v1025
  %v1058 = vadd.f32 %v957, %v1026
  %v1059 = vadd.f32 %v958, %v1027
  %v1060 = vadd.f32 %v959, %v1028
  %v1061 = vadd.f32 %v960, %v1029
  %v1062 = vadd.f32 %v961, %v1030
  %v1063 = vadd.f32 %v962, %v1031
  %v1064 = vadd.f32 %v963, %v1032
  %v1065 = vadd.f32 %v964, %v1033
  %v1066 = vadd.f32 %v965, %v1034
  %v1067 = vadd.f32 %v966, %v1035
  %v1068 = vadd.f32 %v967, %v1036
  %v1069 = vadd.f32 %v968, %v1037
  %1070 = vst.msk [vmem:[%s3] sm:$0xff] %vm46, %v1038
  %1071 = vst.msk [vmem:[%s3 + $0x8] sm:$0xff] %vm46, %v1039
  %1072 = vst.msk [vmem:[%s3 + $0x10] sm:$0xff] %vm46, %v1040
  %1073 = vst.msk [vmem:[%s3 + $0x18] sm:$0xff] %vm46, %v1041
  %1074 = vst.msk [vmem:[%s3 + $0x20] sm:$0xff] %vm46, %v1042
  %1075 = vst.msk [vmem:[%s3 + $0x28] sm:$0xff] %vm46, %v1043
  %1076 = vst.msk [vmem:[%s3 + $0x30] sm:$0xff] %vm46, %v1044
  %1077 = vst.msk [vmem:[%s3 + $0x38] sm:$0xff] %vm46, %v1045
  %1078 = vst.msk [vmem:[%s3 + $0x40] sm:$0xff] %vm46, %v1046
  %1079 = vst.msk [vmem:[%s3 + $0x48] sm:$0xff] %vm46, %v1047
  %1080 = vst.msk [vmem:[%s3 + $0x50] sm:$0xff] %vm46, %v1048
  %1081 = vst.msk [vmem:[%s3 + $0x58] sm:$0xff] %vm46, %v1049
  %1082 = vst.msk [vmem:[%s3 + $0x60] sm:$0xff] %vm46, %v1050
  %1083 = vst.msk [vmem:[%s3 + $0x68] sm:$0xff] %vm46, %v1051
  %1084 = vst.msk [vmem:[%s3 + $0x70] sm:$0xff] %vm46, %v1052
  %1085 = vst.msk [vmem:[%s3 + $0x78] sm:$0xff] %vm46, %v1053
  %1086 = vst.msk [vmem:[%s3 + $0x80] sm:$0xff] %vm46, %v1054
  %1087 = vst.msk [vmem:[%s3 + $0x88] sm:$0xff] %vm46, %v1055
  %1088 = vst.msk [vmem:[%s3 + $0x90] sm:$0xff] %vm46, %v1056
  %1089 = vst.msk [vmem:[%s3 + $0x98] sm:$0xff] %vm46, %v1057
  %1090 = vst.msk [vmem:[%s3 + $0xa0] sm:$0xff] %vm46, %v1058
  %1091 = vst.msk [vmem:[%s3 + $0xa8] sm:$0xff] %vm46, %v1059
  %1092 = vst.msk [vmem:[%s3 + $0xb0] sm:$0xff] %vm46, %v1060
  %1093 = vst.msk [vmem:[%s3 + $0xb8] sm:$0xff] %vm46, %v1061
  %1094 = vst.msk [vmem:[%s3 + $0xc0] sm:$0xff] %vm46, %v1062
  %1095 = vst.msk [vmem:[%s3 + $0xc8] sm:$0xff] %vm46, %v1063
  %1096 = vst.msk [vmem:[%s3 + $0xd0] sm:$0xff] %vm46, %v1064
  %1097 = vst.msk [vmem:[%s3 + $0xd8] sm:$0xff] %vm46, %v1065
  %1098 = vst.msk [vmem:[%s3 + $0xe0] sm:$0xff] %vm46, %v1066
  %1099 = vst.msk [vmem:[%s3 + $0xe8] sm:$0xff] %vm46, %v1067
  %1100 = vst.msk [vmem:[%s3 + $0xf0] sm:$0xff] %vm46, %v1068
  %1101 = vst.msk [vmem:[%s3 + $0xf8] sm:$0xff] %vm46, %v1069
  // Predicated region
  $region14: #{tpu_custom_call.1} parent=0 // pred_check
    _
  $region15: #{tpu_custom_call.1} parent=0 // pred_check_branch
    %1103 = sbr.rel (0) target = $region17
  $region16: #{tpu_custom_call.1} parent=0 // pred_region
    _
  $region17: #{tpu_custom_call.1} parent=0 // pred_fallthru
    _
  // Predicated region
  $region18: #{tpu_custom_call.1} parent=0 // pred_check
    _
  $region19: #{tpu_custom_call.1} parent=0 // pred_check_branch
    %1105 = sbr.rel (0) target = $region21
  $region20: #{tpu_custom_call.1} parent=0 // pred_region
    _
  $region21: #{tpu_custom_call.1} parent=0 // pred_fallthru
    _

</llo_original>
